<compile_context>
chip_gen: v7x
topology: tpu7x:2x2x1
jax: 0.10.0
libtpu: 0.0.40
codegen_flags: <defaults>
</compile_context>

<pallas_src>
import functools

import jax
import jax.numpy as jnp
from jax.experimental import pallas as pl
from jax.experimental.pallas import tpu as pltpu

NEG_SLOPE = 0.01  # nn.LeakyReLU default negative_slope
LANE = 128
SUBLANE = 8


def _round_up(n, m):
    return ((n + m - 1) // m) * m


def _fused_fc_kernel(*refs, num_layers):
    """refs = (x_ref, w0, b0, w1, b1, ..., o_ref). All layers run in-kernel."""
    x_ref = refs[0]
    o_ref = refs[-1]
    wb_refs = refs[1:-1]

    h = x_ref[...]  # (TB, D0_pad) f32
    for i in range(num_layers):
        w_ref = wb_refs[2 * i]      # (Din_pad, Dout_pad) bf16, VMEM-resident
        b_ref = wb_refs[2 * i + 1]  # (1, Dout_pad) f32
        # bf16 MXU operands, f32 accumulation.
        y = jnp.dot(h.astype(jnp.bfloat16), w_ref[...],
                    preferred_element_type=jnp.float32)
        # Fused f32 epilogue on the VPU: bias + LeakyReLU.
        y = y + b_ref[...]
        if i < num_layers - 1:
            y = jnp.where(y >= 0, y, NEG_SLOPE * y)
        h = y  # intermediate stays in vregs; no HBM round-trip.
    o_ref[...] = h.astype(o_ref.dtype)


def fc_block_forward(x, params, *, tile_batch=256):
    """Fused FcBlock forward. params: list of (w: (Din, Dout) f32, b: (1, Dout) f32)."""
    num_layers = len(params)
    B, D0 = x.shape
    dims = [D0] + [w.shape[1] for w, _ in params]
    pdims = [_round_up(d, LANE) for d in dims]  # lane-dense feature dims

    # Batch tiling: tile is a multiple of 8; pad batch to a multiple of the tile.
    b_pad8 = _round_up(B, SUBLANE)
    tb = min(_round_up(tile_batch, SUBLANE), b_pad8)
    b_pad = _round_up(b_pad8, tb)

    # Zero-pad input (extra rows/cols are zero -> exact under the padded weights).
    x_pad = jnp.zeros((b_pad, pdims[0]), jnp.float32).at[:B, :D0].set(x)

    # Pad weights to lane-dense shapes; store weights bf16 (halves weight DMA),
    # biases stay f32 for the f32 epilogue.
    padded = []
    for i, (w, b) in enumerate(params):
        w_pad = jnp.zeros((pdims[i], pdims[i + 1]), jnp.float32)
        w_pad = w_pad.at[:dims[i], :dims[i + 1]].set(w).astype(jnp.bfloat16)
        b_pad_arr = jnp.zeros((1, pdims[i + 1]), jnp.float32)
        b_pad_arr = b_pad_arr.at[:, :dims[i + 1]].set(b.reshape(1, -1))
        padded.append((w_pad, b_pad_arr))

    grid = (b_pad // tb,)

    in_specs = [pl.BlockSpec((tb, pdims[0]), lambda i: (i, 0))]
    for li in range(num_layers):
        din_p, dout_p = pdims[li], pdims[li + 1]
        in_specs.append(pl.BlockSpec((din_p, dout_p), lambda i: (0, 0)))
        in_specs.append(pl.BlockSpec((1, dout_p), lambda i: (0, 0)))
    out_spec = pl.BlockSpec((tb, pdims[-1]), lambda i: (i, 0))

    flops = 2 * b_pad * sum(pdims[i] * pdims[i + 1] for i in range(num_layers))
    bytes_accessed = (
        x_pad.size * 4
        + sum(wp.size * 2 + bp.size * 4 for wp, bp in padded)
        + b_pad * pdims[-1] * 4
    )
    cost = pl.CostEstimate(flops=flops, transcendentals=0,
                           bytes_accessed=bytes_accessed)

    kernel = functools.partial(_fused_fc_kernel, num_layers=num_layers)
    flat_wb = [a for wb in padded for a in wb]

    out_pad = pl.pallas_call(
        kernel,
        out_shape=jax.ShapeDtypeStruct((b_pad, pdims[-1]), jnp.float32),
        grid=grid,
        in_specs=in_specs,
        out_specs=out_spec,
        compiler_params=pltpu.CompilerParams(
            dimension_semantics=("parallel",)),
        cost_estimate=cost,
    )(x_pad, *flat_wb)

    return out_pad[:B, :dims[-1]]


def init_fc_block_params(key, dims):
    """Deterministic init mimicking nn.Linear's default (uniform +/- 1/sqrt(fan_in))."""
    params = []
    layers = len(dims) - 1
    for i in range(layers):
        key, kw, kb = jax.random.split(key, 3)
        fan_in = dims[i]
        bound = 1.0 / jnp.sqrt(fan_in)
        w = jax.random.uniform(kw, (dims[i], dims[i + 1]), jnp.float32,
                               minval=-bound, maxval=bound)
        b = jax.random.uniform(kb, (1, dims[i + 1]), jnp.float32,
                               minval=-bound, maxval=bound)
        params.append((w, b))
    return params


def fc_block_ref(x, params):
    """Pure-JAX reference with the same bf16-operand / f32-accum precision."""
    n = len(params)
    h = x
    for i, (w, b) in enumerate(params):
        y = jnp.dot(h.astype(jnp.bfloat16), w.astype(jnp.bfloat16),
                    preferred_element_type=jnp.float32) + b
        if i < n - 1:
            y = jnp.where(y >= 0, y, NEG_SLOPE * y)
        h = y
    return h


if __name__ == "__main__":
    key = jax.random.PRNGKey(0)
    k_in, k_param = jax.random.split(key)

    # FcBlock(layers=3, dims=[32, 64, 48, 16])
    dims = [32, 64, 48, 16]
    batch = 8

    x = jax.random.normal(k_in, (batch, dims[0]), jnp.float32)
    params = init_fc_block_params(k_param, dims)

    out = fc_block_forward(x, params)
    out = jax.block_until_ready(out)

    ref = fc_block_ref(x, params)
    assert out.shape == (batch, dims[-1])
    assert jnp.allclose(out, ref, atol=1e-3, rtol=1e-3), float(
        jnp.max(jnp.abs(out - ref)))

    print("KERNEL_OK")
</pallas_src>

<mosaic_0001>
module attributes {stable_mosaic.version = 11 : i64} {
  func.func @_fused_fc_kernel(%arg0: i32, %arg1: memref<8x128xf32, #tpu.memory_space<vmem>>, %arg2: memref<128x128xbf16, #tpu.memory_space<vmem>>, %arg3: memref<1x128xf32, #tpu.memory_space<vmem>>, %arg4: memref<128x128xbf16, #tpu.memory_space<vmem>>, %arg5: memref<1x128xf32, #tpu.memory_space<vmem>>, %arg6: memref<128x128xbf16, #tpu.memory_space<vmem>>, %arg7: memref<1x128xf32, #tpu.memory_space<vmem>>, %arg8: memref<8x128xf32, #tpu.memory_space<vmem>>) attributes {dimension_semantics = [#tpu.dimension_semantics<parallel>], iteration_bounds = array<i64: 1>, scalar_prefetch = 0 : i64, scratch_operands = 0 : i64, tpu.core_type = #tpu.core_type<tc>, window_params = [{transform_indices = @transform_0, window_bounds = array<i64: 8, 128>}, {pipeline_mode = #tpu.pipeline_mode<synchronous>, transform_indices = @transform_1, window_bounds = array<i64: 128, 128>}, {pipeline_mode = #tpu.pipeline_mode<synchronous>, transform_indices = @transform_2, window_bounds = array<i64: 1, 128>}, {pipeline_mode = #tpu.pipeline_mode<synchronous>, transform_indices = @transform_3, window_bounds = array<i64: 128, 128>}, {pipeline_mode = #tpu.pipeline_mode<synchronous>, transform_indices = @transform_4, window_bounds = array<i64: 1, 128>}, {pipeline_mode = #tpu.pipeline_mode<synchronous>, transform_indices = @transform_5, window_bounds = array<i64: 128, 128>}, {pipeline_mode = #tpu.pipeline_mode<synchronous>, transform_indices = @transform_6, window_bounds = array<i64: 1, 128>}, {transform_indices = @transform_7, window_bounds = array<i64: 8, 128>}]} {
    %c0 = arith.constant 0 : index
    %c0_0 = arith.constant 0 : index
    %0 = vector.load %arg1[%c0, %c0_0] : memref<8x128xf32, #tpu.memory_space<vmem>>, vector<8x128xf32>
    %1 = arith.truncf %0 : vector<8x128xf32> to vector<8x128xbf16>
    %c0_1 = arith.constant 0 : index
    %c0_2 = arith.constant 0 : index
    %2 = vector.load %arg2[%c0_1, %c0_2] : memref<128x128xbf16, #tpu.memory_space<vmem>>, vector<128x128xbf16>
    %cst = arith.constant dense<0.000000e+00> : vector<8x128xf32>
    %3 = tpu.matmul %1, %2, %cst {dimension_numbers = #tpu.dot_dimension_numbers<[1], [0], [0], [1], [0, 0, 1, 1], [], []>} : vector<8x128xbf16>, vector<128x128xbf16>, vector<8x128xf32> -> vector<8x128xf32>
    %c0_3 = arith.constant 0 : index
    %c0_4 = arith.constant 0 : index
    %4 = vector.load %arg3[%c0_3, %c0_4] : memref<1x128xf32, #tpu.memory_space<vmem>>, vector<1x128xf32>
    %5 = vector.broadcast %4 : vector<1x128xf32> to vector<8x128xf32>
    %6 = arith.addf %3, %5 : vector<8x128xf32>
    %cst_5 = arith.constant 0.000000e+00 : f32
    %7 = vector.broadcast %cst_5 : f32 to vector<8x128xf32>
    %8 = arith.cmpf oge, %6, %7 : vector<8x128xf32>
    %cst_6 = arith.constant 0.00999999977 : f32
    %9 = vector.broadcast %cst_6 : f32 to vector<8x128xf32>
    %10 = arith.mulf %9, %6 : vector<8x128xf32>
    %11 = arith.select %8, %6, %10 : vector<8x128xi1>, vector<8x128xf32>
    %12 = arith.truncf %11 : vector<8x128xf32> to vector<8x128xbf16>
    %c0_7 = arith.constant 0 : index
    %c0_8 = arith.constant 0 : index
    %13 = vector.load %arg4[%c0_7, %c0_8] : memref<128x128xbf16, #tpu.memory_space<vmem>>, vector<128x128xbf16>
    %cst_9 = arith.constant dense<0.000000e+00> : vector<8x128xf32>
    %14 = tpu.matmul %12, %13, %cst_9 {dimension_numbers = #tpu.dot_dimension_numbers<[1], [0], [0], [1], [0, 0, 1, 1], [], []>} : vector<8x128xbf16>, vector<128x128xbf16>, vector<8x128xf32> -> vector<8x128xf32>
    %c0_10 = arith.constant 0 : index
    %c0_11 = arith.constant 0 : index
    %15 = vector.load %arg5[%c0_10, %c0_11] : memref<1x128xf32, #tpu.memory_space<vmem>>, vector<1x128xf32>
    %16 = vector.broadcast %15 : vector<1x128xf32> to vector<8x128xf32>
    %17 = arith.addf %14, %16 : vector<8x128xf32>
    %cst_12 = arith.constant 0.000000e+00 : f32
    %18 = vector.broadcast %cst_12 : f32 to vector<8x128xf32>
    %19 = arith.cmpf oge, %17, %18 : vector<8x128xf32>
    %cst_13 = arith.constant 0.00999999977 : f32
    %20 = vector.broadcast %cst_13 : f32 to vector<8x128xf32>
    %21 = arith.mulf %20, %17 : vector<8x128xf32>
    %22 = arith.select %19, %17, %21 : vector<8x128xi1>, vector<8x128xf32>
    %23 = arith.truncf %22 : vector<8x128xf32> to vector<8x128xbf16>
    %c0_14 = arith.constant 0 : index
    %c0_15 = arith.constant 0 : index
    %24 = vector.load %arg6[%c0_14, %c0_15] : memref<128x128xbf16, #tpu.memory_space<vmem>>, vector<128x128xbf16>
    %cst_16 = arith.constant dense<0.000000e+00> : vector<8x128xf32>
    %25 = tpu.matmul %23, %24, %cst_16 {dimension_numbers = #tpu.dot_dimension_numbers<[1], [0], [0], [1], [0, 0, 1, 1], [], []>} : vector<8x128xbf16>, vector<128x128xbf16>, vector<8x128xf32> -> vector<8x128xf32>
    %c0_17 = arith.constant 0 : index
    %c0_18 = arith.constant 0 : index
    %26 = vector.load %arg7[%c0_17, %c0_18] : memref<1x128xf32, #tpu.memory_space<vmem>>, vector<1x128xf32>
    %27 = vector.broadcast %26 : vector<1x128xf32> to vector<8x128xf32>
    %28 = arith.addf %25, %27 : vector<8x128xf32>
    %c0_19 = arith.constant 0 : index
    %c0_20 = arith.constant 0 : index
    %29 = vector.load %arg8[%c0_19, %c0_20] : memref<8x128xf32, #tpu.memory_space<vmem>>, vector<8x128xf32>
    tpu.vector_store %arg8[%c0_19, %c0_20], %28 {strides = array<i32>} : memref<8x128xf32, #tpu.memory_space<vmem>>, vector<8x128xf32>,
    return
  }
  func.func @transform_0(%arg0: i32) -> (i32, i32) {
    %c0_i32 = arith.constant 0 : i32
    %c0_i32_0 = arith.constant 0 : i32
    return %arg0, %c0_i32 : i32, i32
  }
  func.func @transform_1(%arg0: i32) -> (i32, i32) {
    %c0_i32 = arith.constant 0 : i32
    %c0_i32_0 = arith.constant 0 : i32
    %c0_i32_1 = arith.constant 0 : i32
    return %c0_i32, %c0_i32_0 : i32, i32
  }
  func.func @transform_2(%arg0: i32) -> (i32, i32) {
    %c0_i32 = arith.constant 0 : i32
    %c0_i32_0 = arith.constant 0 : i32
    %c0_i32_1 = arith.constant 0 : i32
    return %c0_i32, %c0_i32_0 : i32, i32
  }
  func.func @transform_3(%arg0: i32) -> (i32, i32) {
    %c0_i32 = arith.constant 0 : i32
    %c0_i32_0 = arith.constant 0 : i32
    %c0_i32_1 = arith.constant 0 : i32
    return %c0_i32, %c0_i32_0 : i32, i32
  }
  func.func @transform_4(%arg0: i32) -> (i32, i32) {
    %c0_i32 = arith.constant 0 : i32
    %c0_i32_0 = arith.constant 0 : i32
    %c0_i32_1 = arith.constant 0 : i32
    return %c0_i32, %c0_i32_0 : i32, i32
  }
  func.func @transform_5(%arg0: i32) -> (i32, i32) {
    %c0_i32 = arith.constant 0 : i32
    %c0_i32_0 = arith.constant 0 : i32
    %c0_i32_1 = arith.constant 0 : i32
    return %c0_i32, %c0_i32_0 : i32, i32
  }
  func.func @transform_6(%arg0: i32) -> (i32, i32) {
    %c0_i32 = arith.constant 0 : i32
    %c0_i32_0 = arith.constant 0 : i32
    %c0_i32_1 = arith.constant 0 : i32
    return %c0_i32, %c0_i32_0 : i32, i32
  }
  func.func @transform_7(%arg0: i32) -> (i32, i32) {
    %c0_i32 = arith.constant 0 : i32
    %c0_i32_0 = arith.constant 0 : i32
    return %arg0, %c0_i32 : i32, i32
  }
}

</mosaic_0001>

<llo_original>
// kernel: tpu_custom_call.1
$region0: #{tpu_custom_call.1}
  #allocation0 [shape = 'u32[]', space=smem, size = 0x4, offset = 0x4, fixed_abs, tag = 'smem constant byte address 0x4 - core index']
  #allocation1 [shape = 'u32[144,128]{1,0:T(1,128)}', space=vmem, size = 0x12000, scoped, tag = 'internal scratch']
  %s0 = inlined_call_operand.hbm [shape: f32[8,128], index: 0, kind: input, shape index: {}]
  %s1 = inlined_call_operand.hbm [shape: bf16[128,128], index: 1, kind: input, shape index: {}]
  %s2 = inlined_call_operand.vmem [shape: f32[1,128], index: 2, kind: input, shape index: {}]
  %s3 = inlined_call_operand.hbm [shape: bf16[128,128], index: 3, kind: input, shape index: {}]
  %s4 = inlined_call_operand.vmem [shape: f32[1,128], index: 4, kind: input, shape index: {}]
  %s5 = inlined_call_operand.hbm [shape: bf16[128,128], index: 5, kind: input, shape index: {}]
  %s6 = inlined_call_operand.vmem [shape: f32[1,128], index: 6, kind: input, shape index: {}]
  %s7 = inlined_call_operand.hbm [shape: f32[8,128], index: 7, kind: output, shape index: {}]
  %s8 = sld [smem:[#allocation0]]
  $region54: #{tpu_custom_call.1} parent=0
    _
  %s10 = ssub.s32 1, %s8
  %s11 = scalar_select 0, %s10, %s8
  $region1: #{tpu_custom_call.1} parent=0
    #allocation2 [shape = 'u8[4096]{0}', space=vmem, size = 0x1000, scoped, tag = 'input window, operand 0, single buffered']
    #allocation3 [shape = 's32[1]{0}', space=sflag, size = 0x4, scoped, tag = 'scoped memory for tpu_custom_call.1']
    #allocation4 [shape = 's32[1]{0}', space=sflag, size = 0x4, scoped, tag = 'scoped memory for tpu_custom_call.1']
    #allocation5 [shape = 'u8[32768]{0}', space=vmem, size = 0x8000, scoped, tag = 'input window, operand 1, single buffered']
    #allocation6 [shape = 's32[1]{0}', space=sflag, size = 0x4, scoped, tag = 'scoped memory for tpu_custom_call.1']
    #allocation7 [shape = 'u8[32768]{0}', space=vmem, size = 0x8000, scoped, tag = 'input window, operand 3, single buffered']
    #allocation8 [shape = 'u8[32768]{0}', space=vmem, size = 0x8000, scoped, tag = 'input window, operand 5, single buffered']
    #allocation9 [shape = 's32[1]{0}', space=sflag, size = 0x4, scoped, tag = 'scoped memory for tpu_custom_call.1']
    #allocation10 [shape = 'u8[4096]{0}', space=vmem, size = 0x1000, scoped, tag = 'output window, operand 0, single buffered']
    %12 = vsyncpa [#allocation3], 0
    %13 = vsyncpa [#allocation6], 0
    %14 = vsyncpa [#allocation9], 0
    %15 = vsyncpa [#allocation4], 0
    // Predicated region
    $region2: #{tpu_custom_call.1} parent=1 // pred_check
      _
    $region3: #{tpu_custom_call.1} parent=1 // pred_check_branch
      %17 = sbr.rel (0) target = $region5
    $region4: #{tpu_custom_call.1} parent=1 // pred_region
      %s19 = ssub.s32 128, 128
      %20 = vsyncadd [#allocation3], %s19
      %s22 = sshll.u32 [#allocation2], 4
      %s23 = int_to_ptr.vmem [resolvable:$true] %s22
      %25 = dma.hbm_to_vmem [thread:$0]  %s0, 128, %s23, [#allocation3]
    $region5: #{tpu_custom_call.1} parent=1 // pred_fallthru
      _
    // Predicated region
    $region6: #{tpu_custom_call.1} parent=1 // pred_check
      _
    $region7: #{tpu_custom_call.1} parent=1 // pred_check_branch
      %27 = sbr.rel (0) target = $region9
    $region8: #{tpu_custom_call.1} parent=1 // pred_region
      %s29 = ssub.s32 1024, 1024
      %30 = vsyncadd [#allocation6], %s29
      %s31 = sshll.u32 [#allocation5], 4
      %s32 = int_to_ptr.vmem [resolvable:$true] %s31
      %37 = dma.hbm_to_vmem [thread:$0]  %s1, 1024, %s32, [#allocation6], 64, 64, 4
    $region9: #{tpu_custom_call.1} parent=1 // pred_fallthru
      _
    // Predicated region
    $region10: #{tpu_custom_call.1} parent=1 // pred_check
      _
    $region11: #{tpu_custom_call.1} parent=1 // pred_check_branch
      %39 = sbr.rel (0) target = $region13
    $region12: #{tpu_custom_call.1} parent=1 // pred_region
      _
    $region13: #{tpu_custom_call.1} parent=1 // pred_fallthru
      _
    // Predicated region
    $region14: #{tpu_custom_call.1} parent=1 // pred_check
      _
    $region15: #{tpu_custom_call.1} parent=1 // pred_check_branch
      %41 = sbr.rel (0) target = $region17
    $region16: #{tpu_custom_call.1} parent=1 // pred_region
      %s43 = ssub.s32 1024, 1024
      %44 = vsyncadd [#allocation6], %s43
      %s45 = sshll.u32 [#allocation7], 4
      %s46 = int_to_ptr.vmem [resolvable:$true] %s45
      %51 = dma.hbm_to_vmem [thread:$0]  %s3, 1024, %s46, [#allocation6], 64, 64, 4
    $region17: #{tpu_custom_call.1} parent=1 // pred_fallthru
      _
    // Predicated region
    $region18: #{tpu_custom_call.1} parent=1 // pred_check
      _
    $region19: #{tpu_custom_call.1} parent=1 // pred_check_branch
      %53 = sbr.rel (0) target = $region21
    $region20: #{tpu_custom_call.1} parent=1 // pred_region
      _
    $region21: #{tpu_custom_call.1} parent=1 // pred_fallthru
      _
    // Predicated region
    $region22: #{tpu_custom_call.1} parent=1 // pred_check
      _
    $region23: #{tpu_custom_call.1} parent=1 // pred_check_branch
      %55 = sbr.rel (0) target = $region25
    $region24: #{tpu_custom_call.1} parent=1 // pred_region
      %s57 = ssub.s32 1024, 1024
      %58 = vsyncadd [#allocation9], %s57
      %s59 = sshll.u32 [#allocation8], 4
      %s60 = int_to_ptr.vmem [resolvable:$true] %s59
      %65 = dma.hbm_to_vmem [thread:$0]  %s5, 1024, %s60, [#allocation9], 64, 64, 4
    $region25: #{tpu_custom_call.1} parent=1 // pred_fallthru
      _
    // Predicated region
    $region26: #{tpu_custom_call.1} parent=1 // pred_check
      _
    $region27: #{tpu_custom_call.1} parent=1 // pred_check_branch
      %67 = sbr.rel (0) target = $region29
    $region28: #{tpu_custom_call.1} parent=1 // pred_region
      _
    $region29: #{tpu_custom_call.1} parent=1 // pred_fallthru
      _
    // Predicated region
    $region30: #{tpu_custom_call.1} parent=1 // pred_check
      _
    $region31: #{tpu_custom_call.1} parent=1 // pred_check_branch
      %69 = sbr.rel (0) target = $region33
    $region32: #{tpu_custom_call.1} parent=1 // pred_region
      %70 = dma.done [#allocation3], 128
    $region33: #{tpu_custom_call.1} parent=1 // pred_fallthru
      _
    // Predicated region
    $region34: #{tpu_custom_call.1} parent=1 // pred_check
      _
    $region35: #{tpu_custom_call.1} parent=1 // pred_check_branch
      %72 = sbr.rel (0) target = $region37
    $region36: #{tpu_custom_call.1} parent=1 // pred_region
      %73 = dma.done [#allocation6], 1024
    $region37: #{tpu_custom_call.1} parent=1 // pred_fallthru
      _
    // Predicated region
    $region38: #{tpu_custom_call.1} parent=1 // pred_check
      _
    $region39: #{tpu_custom_call.1} parent=1 // pred_check_branch
      %75 = sbr.rel (0) target = $region41
    $region40: #{tpu_custom_call.1} parent=1 // pred_region
      %76 = dma.done [#allocation6], 1024
    $region41: #{tpu_custom_call.1} parent=1 // pred_fallthru
      _
    // Predicated region
    $region42: #{tpu_custom_call.1} parent=1 // pred_check
      _
    $region43: #{tpu_custom_call.1} parent=1 // pred_check_branch
      %78 = sbr.rel (0) target = $region45
    $region44: #{tpu_custom_call.1} parent=1 // pred_region
      %79 = dma.done [#allocation9], 1024
    $region45: #{tpu_custom_call.1} parent=1 // pred_fallthru
      _
    %v81 = vld [vmem:[#allocation2] sm:$0xff]
    %v82 = vpack.c.bf16 %v81, %v81
    %v83 = vld [vmem:[#allocation5] sm:$0xf]
    %v84 = vld [vmem:[#allocation5 + $0x4] sm:$0xf]
    %v85 = vld [vmem:[#allocation5 + $0x8] sm:$0xf]
    %v86 = vld [vmem:[#allocation5 + $0xc] sm:$0xf]
    %v87 = vld [vmem:[#allocation5 + $0x10] sm:$0xf]
    %v88 = vld [vmem:[#allocation5 + $0x14] sm:$0xf]
    %v89 = vld [vmem:[#allocation5 + $0x18] sm:$0xf]
    %v90 = vld [vmem:[#allocation5 + $0x1c] sm:$0xf]
    %v91 = vld [vmem:[#allocation5 + $0x20] sm:$0xf]
    %v92 = vld [vmem:[#allocation5 + $0x24] sm:$0xf]
    %v93 = vld [vmem:[#allocation5 + $0x28] sm:$0xf]
    %v94 = vld [vmem:[#allocation5 + $0x2c] sm:$0xf]
    %v95 = vld [vmem:[#allocation5 + $0x30] sm:$0xf]
    %v96 = vld [vmem:[#allocation5 + $0x34] sm:$0xf]
    %v97 = vld [vmem:[#allocation5 + $0x38] sm:$0xf]
    %v98 = vld [vmem:[#allocation5 + $0x3c] sm:$0xf]
    %v99 = vld [vmem:[%s2] sm:$0x1]
    %v101 = vlaneseq
    %v102 = vshrl.u32 %v101, 7
    %v103 = vsub.s32 0, %v102
    %v104 = vrot.slane %v99, %v103
    %v122 = vunpack.c.l.b16 %v83
    %v123 = vunpack.c.l.b16 %v84
    %v124 = vunpack.c.l.b16 %v85
    %v125 = vunpack.c.l.b16 %v86
    %v126 = vunpack.c.l.b16 %v87
    %v127 = vunpack.c.l.b16 %v88
    %v128 = vunpack.c.l.b16 %v89
    %v129 = vunpack.c.l.b16 %v90
    %v130 = vunpack.c.l.b16 %v91
    %v131 = vunpack.c.l.b16 %v92
    %v132 = vunpack.c.l.b16 %v93
    %v133 = vunpack.c.l.b16 %v94
    %v134 = vunpack.c.l.b16 %v95
    %v135 = vunpack.c.l.b16 %v96
    %v136 = vunpack.c.l.b16 %v97
    %v137 = vunpack.c.l.b16 %v98
    %v138 = vpack.c.b16 %v123, %v122
    %v139 = vpack.c.b16 %v125, %v124
    %v140 = vpack.c.b16 %v127, %v126
    %v141 = vpack.c.b16 %v129, %v128
    %v142 = vpack.c.b16 %v131, %v130
    %v143 = vpack.c.b16 %v133, %v132
    %v144 = vpack.c.b16 %v135, %v134
    %v145 = vpack.c.b16 %v137, %v136
    %154 = vmatprep.subr.bf16.mxu0 0
    %155 = vmatpush1.bf16.msra.mxu0 %v138
    %156 = vmatprep.subr.bf16.mxu0 0
    %157 = vmatpush1.bf16.msra.mxu0 %v139
    %158 = vmatprep.subr.bf16.mxu0 0
    %159 = vmatpush1.bf16.msra.mxu0 %v140
    %160 = vmatprep.subr.bf16.mxu0 0
    %161 = vmatpush1.bf16.msra.mxu0 %v141
    %162 = vmatprep.subr.bf16.mxu0 0
    %163 = vmatpush1.bf16.msra.mxu0 %v142
    %164 = vmatprep.subr.bf16.mxu0 0
    %165 = vmatpush1.bf16.msra.mxu0 %v143
    %166 = vmatprep.subr.bf16.mxu0 0
    %167 = vmatpush1.bf16.msra.mxu0 %v144
    %168 = vmatprep.subr.bf16.mxu0 0
    %169 = vmatpush1.bf16.msra.mxu0 %v145
    %170 = vmatprep.subr.bf16.mxu0 0
    %171 = vmatpush1.bf16.msra.mxu0 0
    %172 = vmatprep.subr.bf16.mxu0 0
    %173 = vmatpush1.bf16.msra.mxu0 0
    %174 = vmatprep.subr.bf16.mxu0 0
    %175 = vmatpush1.bf16.msra.mxu0 0
    %176 = vmatprep.subr.bf16.mxu0 0
    %177 = vmatpush1.bf16.msra.mxu0 0
    %178 = vmatprep.subr.bf16.mxu0 0
    %179 = vmatpush1.bf16.msra.mxu0 0
    %180 = vmatprep.subr.bf16.mxu0 0
    %181 = vmatpush1.bf16.msra.mxu0 0
    %182 = vmatprep.subr.bf16.mxu0 0
    %183 = vmatpush1.bf16.msra.mxu0 0
    %184 = vmatprep.subr.bf16.mxu0 0
    %185 = vmatpush1.bf16.msra.mxu0 0
    %186 = vmatprep.mubr.bf16.mxu0 0
    %187 = vmatmul.mubr.bf16.gmra.mrb[0].mxu0 %v82
    %v188 = vpop.f32.mrb[0].mxu0
    %v189 = vadd.f32 %v104, %v188
    %v190 = vpop.f32.mrb[0].mxu0
    %v191 = vpop.f32.mrb[0].mxu0
    %v192 = vpop.f32.mrb[0].mxu0
    %193 = vdwg.mxu0
    %vm194 = vcmp.ge.f32.partialorder %v189, 0.0
    %v195 = vmul.f32 %v189, 0.01
    %v196 = vsel %vm194, %v189, %v195
    %v197 = vpack.c.bf16 %v196, %v196
    %v198 = vld [vmem:[#allocation7] sm:$0xf]
    %v199 = vld [vmem:[#allocation7 + $0x4] sm:$0xf]
    %v200 = vld [vmem:[#allocation7 + $0x8] sm:$0xf]
    %v201 = vld [vmem:[#allocation7 + $0xc] sm:$0xf]
    %v202 = vld [vmem:[#allocation7 + $0x10] sm:$0xf]
    %v203 = vld [vmem:[#allocation7 + $0x14] sm:$0xf]
    %v204 = vld [vmem:[#allocation7 + $0x18] sm:$0xf]
    %v205 = vld [vmem:[#allocation7 + $0x1c] sm:$0xf]
    %v206 = vld [vmem:[#allocation7 + $0x20] sm:$0xf]
    %v207 = vld [vmem:[#allocation7 + $0x24] sm:$0xf]
    %v208 = vld [vmem:[#allocation7 + $0x28] sm:$0xf]
    %v209 = vld [vmem:[#allocation7 + $0x2c] sm:$0xf]
    %v210 = vld [vmem:[#allocation7 + $0x30] sm:$0xf]
    %v211 = vld [vmem:[#allocation7 + $0x34] sm:$0xf]
    %v212 = vld [vmem:[#allocation7 + $0x38] sm:$0xf]
    %v213 = vld [vmem:[#allocation7 + $0x3c] sm:$0xf]
    %v214 = vld [vmem:[%s4] sm:$0x1]
    %v216 = vlaneseq
    %v217 = vshrl.u32 %v216, 7
    %v218 = vsub.s32 0, %v217
    %v219 = vrot.slane %v214, %v218
    %v237 = vunpack.c.l.b16 %v198
    %v238 = vunpack.c.l.b16 %v199
    %v239 = vunpack.c.l.b16 %v200
    %v240 = vunpack.c.l.b16 %v201
    %v241 = vunpack.c.l.b16 %v202
    %v242 = vunpack.c.l.b16 %v203
    %v243 = vunpack.c.l.b16 %v204
    %v244 = vunpack.c.l.b16 %v205
    %v245 = vunpack.c.l.b16 %v206
    %v246 = vunpack.c.l.b16 %v207
    %v247 = vunpack.c.l.b16 %v208
    %v248 = vunpack.c.l.b16 %v209
    %v249 = vunpack.c.l.b16 %v210
    %v250 = vunpack.c.l.b16 %v211
    %v251 = vunpack.c.l.b16 %v212
    %v252 = vunpack.c.l.b16 %v213
    %v253 = vpack.c.b16 %v238, %v237
    %v254 = vpack.c.b16 %v240, %v239
    %v255 = vpack.c.b16 %v242, %v241
    %v256 = vpack.c.b16 %v244, %v243
    %v257 = vpack.c.b16 %v246, %v245
    %v258 = vpack.c.b16 %v248, %v247
    %v259 = vpack.c.b16 %v250, %v249
    %v260 = vpack.c.b16 %v252, %v251
    %269 = vmatprep.subr.bf16.mxu0 0
    %270 = vmatpush1.bf16.msra.mxu0 %v253
    %271 = vmatprep.subr.bf16.mxu0 0
    %272 = vmatpush1.bf16.msra.mxu0 %v254
    %273 = vmatprep.subr.bf16.mxu0 0
    %274 = vmatpush1.bf16.msra.mxu0 %v255
    %275 = vmatprep.subr.bf16.mxu0 0
    %276 = vmatpush1.bf16.msra.mxu0 %v256
    %277 = vmatprep.subr.bf16.mxu0 0
    %278 = vmatpush1.bf16.msra.mxu0 %v257
    %279 = vmatprep.subr.bf16.mxu0 0
    %280 = vmatpush1.bf16.msra.mxu0 %v258
    %281 = vmatprep.subr.bf16.mxu0 0
    %282 = vmatpush1.bf16.msra.mxu0 %v259
    %283 = vmatprep.subr.bf16.mxu0 0
    %284 = vmatpush1.bf16.msra.mxu0 %v260
    %285 = vmatprep.subr.bf16.mxu0 0
    %286 = vmatpush1.bf16.msra.mxu0 0
    %287 = vmatprep.subr.bf16.mxu0 0
    %288 = vmatpush1.bf16.msra.mxu0 0
    %289 = vmatprep.subr.bf16.mxu0 0
    %290 = vmatpush1.bf16.msra.mxu0 0
    %291 = vmatprep.subr.bf16.mxu0 0
    %292 = vmatpush1.bf16.msra.mxu0 0
    %293 = vmatprep.subr.bf16.mxu0 0
    %294 = vmatpush1.bf16.msra.mxu0 0
    %295 = vmatprep.subr.bf16.mxu0 0
    %296 = vmatpush1.bf16.msra.mxu0 0
    %297 = vmatprep.subr.bf16.mxu0 0
    %298 = vmatpush1.bf16.msra.mxu0 0
    %299 = vmatprep.subr.bf16.mxu0 0
    %300 = vmatpush1.bf16.msra.mxu0 0
    %301 = vmatprep.mubr.bf16.mxu0 0
    %302 = vmatmul.mubr.bf16.gmra.mrb[0].mxu0 %v197
    %v303 = vpop.f32.mrb[0].mxu0
    %v304 = vadd.f32 %v219, %v303
    %v305 = vpop.f32.mrb[0].mxu0
    %v306 = vpop.f32.mrb[0].mxu0
    %v307 = vpop.f32.mrb[0].mxu0
    %308 = vdwg.mxu0
    %vm309 = vcmp.ge.f32.partialorder %v304, 0.0
    %v310 = vmul.f32 %v304, 0.01
    %v311 = vsel %vm309, %v304, %v310
    %v312 = vpack.c.bf16 %v311, %v311
    %v313 = vld [vmem:[#allocation8] sm:$0xf]
    %v314 = vld [vmem:[#allocation8 + $0x4] sm:$0xf]
    %v315 = vld [vmem:[#allocation8 + $0x8] sm:$0xf]
    %v316 = vld [vmem:[#allocation8 + $0xc] sm:$0xf]
    %v317 = vld [vmem:[#allocation8 + $0x10] sm:$0xf]
    %v318 = vld [vmem:[#allocation8 + $0x14] sm:$0xf]
    %v319 = vld [vmem:[#allocation8 + $0x18] sm:$0xf]
    %v320 = vld [vmem:[#allocation8 + $0x1c] sm:$0xf]
    %v321 = vld [vmem:[#allocation8 + $0x20] sm:$0xf]
    %v322 = vld [vmem:[#allocation8 + $0x24] sm:$0xf]
    %v323 = vld [vmem:[#allocation8 + $0x28] sm:$0xf]
    %v324 = vld [vmem:[#allocation8 + $0x2c] sm:$0xf]
    %v325 = vld [vmem:[#allocation8 + $0x30] sm:$0xf]
    %v326 = vld [vmem:[#allocation8 + $0x34] sm:$0xf]
    %v327 = vld [vmem:[#allocation8 + $0x38] sm:$0xf]
    %v328 = vld [vmem:[#allocation8 + $0x3c] sm:$0xf]
    %v329 = vld [vmem:[%s6] sm:$0x1]
    %v331 = vlaneseq
    %v332 = vshrl.u32 %v331, 7
    %v333 = vsub.s32 0, %v332
    %v334 = vrot.slane %v329, %v333
    %v352 = vunpack.c.l.b16 %v313
    %v353 = vunpack.c.l.b16 %v314
    %v354 = vunpack.c.l.b16 %v315
    %v355 = vunpack.c.l.b16 %v316
    %v356 = vunpack.c.l.b16 %v317
    %v357 = vunpack.c.l.b16 %v318
    %v358 = vunpack.c.l.b16 %v319
    %v359 = vunpack.c.l.b16 %v320
    %v360 = vunpack.c.l.b16 %v321
    %v361 = vunpack.c.l.b16 %v322
    %v362 = vunpack.c.l.b16 %v323
    %v363 = vunpack.c.l.b16 %v324
    %v364 = vunpack.c.l.b16 %v325
    %v365 = vunpack.c.l.b16 %v326
    %v366 = vunpack.c.l.b16 %v327
    %v367 = vunpack.c.l.b16 %v328
    %v368 = vpack.c.b16 %v353, %v352
    %v369 = vpack.c.b16 %v355, %v354
    %v370 = vpack.c.b16 %v357, %v356
    %v371 = vpack.c.b16 %v359, %v358
    %v372 = vpack.c.b16 %v361, %v360
    %v373 = vpack.c.b16 %v363, %v362
    %v374 = vpack.c.b16 %v365, %v364
    %v375 = vpack.c.b16 %v367, %v366
    %384 = vmatprep.subr.bf16.mxu0 0
    %385 = vmatpush1.bf16.msra.mxu0 %v368
    %386 = vmatprep.subr.bf16.mxu0 0
    %387 = vmatpush1.bf16.msra.mxu0 %v369
    %388 = vmatprep.subr.bf16.mxu0 0
    %389 = vmatpush1.bf16.msra.mxu0 %v370
    %390 = vmatprep.subr.bf16.mxu0 0
    %391 = vmatpush1.bf16.msra.mxu0 %v371
    %392 = vmatprep.subr.bf16.mxu0 0
    %393 = vmatpush1.bf16.msra.mxu0 %v372
    %394 = vmatprep.subr.bf16.mxu0 0
    %395 = vmatpush1.bf16.msra.mxu0 %v373
    %396 = vmatprep.subr.bf16.mxu0 0
    %397 = vmatpush1.bf16.msra.mxu0 %v374
    %398 = vmatprep.subr.bf16.mxu0 0
    %399 = vmatpush1.bf16.msra.mxu0 %v375
    %400 = vmatprep.subr.bf16.mxu0 0
    %401 = vmatpush1.bf16.msra.mxu0 0
    %402 = vmatprep.subr.bf16.mxu0 0
    %403 = vmatpush1.bf16.msra.mxu0 0
    %404 = vmatprep.subr.bf16.mxu0 0
    %405 = vmatpush1.bf16.msra.mxu0 0
    %406 = vmatprep.subr.bf16.mxu0 0
    %407 = vmatpush1.bf16.msra.mxu0 0
    %408 = vmatprep.subr.bf16.mxu0 0
    %409 = vmatpush1.bf16.msra.mxu0 0
    %410 = vmatprep.subr.bf16.mxu0 0
    %411 = vmatpush1.bf16.msra.mxu0 0
    %412 = vmatprep.subr.bf16.mxu0 0
    %413 = vmatpush1.bf16.msra.mxu0 0
    %414 = vmatprep.subr.bf16.mxu0 0
    %415 = vmatpush1.bf16.msra.mxu0 0
    %416 = vmatprep.mubr.bf16.mxu0 0
    %417 = vmatmul.mubr.bf16.gmra.mrb[0].mxu0 %v312
    %v418 = vpop.f32.mrb[0].mxu0
    %v419 = vadd.f32 %v334, %v418
    %v420 = vpop.f32.mrb[0].mxu0
    %v421 = vpop.f32.mrb[0].mxu0
    %v422 = vpop.f32.mrb[0].mxu0
    %423 = vdwg.mxu0
    %424 = vst [vmem:[#allocation10] sm:$0xff] %v419
    // Predicated region
    $region46: #{tpu_custom_call.1} parent=1 // pred_check
      _
    $region47: #{tpu_custom_call.1} parent=1 // pred_check_branch
      %426 = sbr.rel (0) target = $region49
    $region48: #{tpu_custom_call.1} parent=1 // pred_region
      %s428 = ssub.s32 128, 128
      %429 = vsyncadd [#allocation4], %s428
      %s431 = sshll.u32 [#allocation10], 4
      %s432 = int_to_ptr.vmem [resolvable:$true] %s431
      %434 = dma.vmem_to_hbm [thread:$0]  %s432, 128, %s7, [#allocation4]
    $region49: #{tpu_custom_call.1} parent=1 // pred_fallthru
      _
    // Predicated region
    $region50: #{tpu_custom_call.1} parent=1 // pred_check
      _
    $region51: #{tpu_custom_call.1} parent=1 // pred_check_branch
      %436 = sbr.rel (0) target = $region53
    $region52: #{tpu_custom_call.1} parent=1 // pred_region
      %437 = dma.done [#allocation4], 128
    $region53: #{tpu_custom_call.1} parent=1 // pred_fallthru
      _
    %438 = vsyncpa [#allocation3], 1
    %439 = vsyncpa [#allocation6], 1
    %440 = vsyncpa [#allocation9], 1
    %441 = vsyncpa [#allocation4], 1

</llo_original>
